<compile_context>
chip_gen: v7x
topology: tpu7x:2x2x1
jax: 0.10.0
libtpu: 0.0.40
codegen_flags: <defaults>
</compile_context>

<pallas_src>
import jax
import jax.numpy as jnp
from jax.experimental import pallas as pl
from jax.experimental.pallas import tpu as pltpu

_LANES = 128                          # vreg lane width
_MAX_TILE_ROWS = 2048                 # (2048, 128) f32 tile = 1 MiB per buffer
_TARGET_GRID_STEPS = 8                # >= 2 steps per TC (v7x megacore) + pipeline priming
_SMALL_N = 1 << 16                    # below this, plain jnp beats a kernel launch
_VMEM_LIMIT_BYTES = 32 * 1024 * 1024  # explicit budget, safe on v5e/v6e/v7x


def _sublane_multiple(dtype) -> int:
    # Minimum second-minor tile granularity per dtype packing (f32:8, bf16:16, int8:32).
    return {4: 8, 2: 16, 1: 32}.get(jnp.dtype(dtype).itemsize, 8)


def _linear_kernel(x_ref, w_ref, b_ref, o_ref):
    # x_ref / o_ref: (tm, 128) VMEM tiles.  w_ref / b_ref: (1, 1) SMEM scalars.
    w = w_ref[0, 0]
    b = b_ref[0, 0]
    o_ref[...] = x_ref[...] * w + b


def linear_regression_v2(x: jax.Array, weight: jax.Array, bias: jax.Array) -> jax.Array:
    """x: (..., 1), weight: (1, 1), bias: (1,) -> x @ W^T + b, same shape as x."""
    w2d = weight.reshape(1, 1).astype(x.dtype)
    b2d = bias.reshape(1, 1).astype(x.dtype)

    total = x.size
    # Small-N fast path: XLA fuses the scalar FMA into one elementwise op.
    if total < _SMALL_N:
        return x * w2d[0, 0] + b2d[0, 0]

    orig_shape = x.shape
    flat = x.reshape(-1)

    # Lane-dense slab: rows of 128 elements.  Pad only the (<= 127-element)
    # tail needed to reach the lane boundary; the ragged final *row block* is
    # handled by Pallas's partial-block masking, so no padding to a tile multiple.
    rows = pl.cdiv(total, _LANES)
    pad = rows * _LANES - total
    if pad:
        flat = jnp.pad(flat, (0, pad))
    slab = flat.reshape(rows, _LANES)

    # Tile rows so there are >= _TARGET_GRID_STEPS grid steps, rounded to the
    # sublane granularity and capped so the double-buffered in+out working set
    # stays ~4 MiB.
    sub = _sublane_multiple(x.dtype)
    tm = pl.cdiv(rows, _TARGET_GRID_STEPS)
    tm = ((tm + sub - 1) // sub) * sub
    tm = max(sub, min(_MAX_TILE_ROWS, tm))
    grid = (pl.cdiv(rows, tm),)

    out_slab = pl.pallas_call(
        _linear_kernel,
        out_shape=jax.ShapeDtypeStruct((rows, _LANES), x.dtype),
        grid=grid,
        in_specs=[
            pl.BlockSpec((tm, _LANES), lambda i: (i, 0)),
            pl.BlockSpec(memory_space=pltpu.MemorySpace.SMEM),
            pl.BlockSpec(memory_space=pltpu.MemorySpace.SMEM),
        ],
        out_specs=pl.BlockSpec((tm, _LANES), lambda i: (i, 0)),
        compiler_params=pltpu.CompilerParams(
            dimension_semantics=("parallel",),
            vmem_limit_bytes=_VMEM_LIMIT_BYTES,
        ),
    )(slab, w2d, b2d)

    out_flat = out_slab.reshape(-1)
    if pad:
        out_flat = out_flat[:total]
    return out_flat.reshape(orig_shape)


if __name__ == "__main__":
    key = jax.random.PRNGKey(0)
    kw, kb, k1, k2, k3 = jax.random.split(key, 5)

    # Parameters with nn.Linear(1, 1) shapes.
    weight = jax.random.normal(kw, (1, 1), dtype=jnp.float32)  # (out_features, in_features)
    bias = jax.random.normal(kb, (1,), dtype=jnp.float32)

    def ref_fn(x):
        return x @ weight.T + bias

    # 1) Tiny batch like the module's typical usage -> small-N jnp fast path.
    x1 = jax.random.normal(k1, (8, 1), dtype=jnp.float32)
    o1 = jax.block_until_ready(linear_regression_v2(x1, weight, bias))
    assert o1.shape == x1.shape
    assert jnp.allclose(o1, ref_fn(x1), atol=1e-6)

    # 2) Misaligned batch -> Pallas path: 16-element lane pad + ragged final row block.
    x2 = jax.random.normal(k2, (70_000, 1), dtype=jnp.float32)
    o2 = jax.block_until_ready(linear_regression_v2(x2, weight, bias))
    assert o2.shape == x2.shape
    assert jnp.allclose(o2, ref_fn(x2), atol=1e-6)

    # 3) Lane-aligned batch -> Pallas path with zero padding / slicing.
    x3 = jax.random.normal(k3, (131_072, 1), dtype=jnp.float32)
    o3 = jax.block_until_ready(linear_regression_v2(x3, weight, bias))
    assert o3.shape == x3.shape
    assert jnp.allclose(o3, ref_fn(x3), atol=1e-6)

    print("KERNEL_OK")
</pallas_src>

<mosaic_0001>
module attributes {stable_mosaic.version = 11 : i64} {
  func.func @_linear_kernel(%arg0: i32, %arg1: memref<72x128xf32, #tpu.memory_space<vmem>>, %arg2: memref<1x1xf32, #tpu.memory_space<smem>>, %arg3: memref<1x1xf32, #tpu.memory_space<smem>>, %arg4: memref<72x128xf32, #tpu.memory_space<vmem>>) attributes {dimension_semantics = [#tpu.dimension_semantics<parallel>], iteration_bounds = array<i64: 8>, scalar_prefetch = 0 : i64, scratch_operands = 0 : i64, tpu.core_type = #tpu.core_type<tc>, window_params = [{transform_indices = @transform_0, window_bounds = array<i64: 72, 128>}, {transform_indices = @transform_1, window_bounds = array<i64: 1, 1>}, {transform_indices = @transform_2, window_bounds = array<i64: 1, 1>}, {transform_indices = @transform_3, window_bounds = array<i64: 72, 128>}]} {
    %c0 = arith.constant 0 : index
    %c0_0 = arith.constant 0 : index
    %0 = memref.load %arg2[%c0, %c0_0] : memref<1x1xf32, #tpu.memory_space<smem>>
    %c0_1 = arith.constant 0 : index
    %c0_2 = arith.constant 0 : index
    %1 = memref.load %arg3[%c0_1, %c0_2] : memref<1x1xf32, #tpu.memory_space<smem>>
    %c0_3 = arith.constant 0 : index
    %c0_4 = arith.constant 0 : index
    %2 = vector.load %arg1[%c0_3, %c0_4] : memref<72x128xf32, #tpu.memory_space<vmem>>, vector<72x128xf32>
    %3 = vector.broadcast %0 : f32 to vector<72x128xf32>
    %4 = arith.mulf %2, %3 : vector<72x128xf32>
    %5 = vector.broadcast %1 : f32 to vector<72x128xf32>
    %6 = arith.addf %4, %5 : vector<72x128xf32>
    %c0_5 = arith.constant 0 : index
    %c0_6 = arith.constant 0 : index
    %7 = vector.load %arg4[%c0_5, %c0_6] : memref<72x128xf32, #tpu.memory_space<vmem>>, vector<72x128xf32>
    tpu.vector_store %arg4[%c0_5, %c0_6], %6 {strides = array<i32>} : memref<72x128xf32, #tpu.memory_space<vmem>>, vector<72x128xf32>,
    return
  }
  func.func @transform_0(%arg0: i32) -> (i32, i32) {
    %c0_i32 = arith.constant 0 : i32
    %c0_i32_0 = arith.constant 0 : i32
    return %arg0, %c0_i32 : i32, i32
  }
  func.func @transform_1(%arg0: i32) -> (i32, i32) {
    %c0_i32 = arith.constant 0 : i32
    %c0_i32_0 = arith.constant 0 : i32
    %c0_i32_1 = arith.constant 0 : i32
    return %c0_i32, %c0_i32_0 : i32, i32
  }
  func.func @transform_2(%arg0: i32) -> (i32, i32) {
    %c0_i32 = arith.constant 0 : i32
    %c0_i32_0 = arith.constant 0 : i32
    %c0_i32_1 = arith.constant 0 : i32
    return %c0_i32, %c0_i32_0 : i32, i32
  }
  func.func @transform_3(%arg0: i32) -> (i32, i32) {
    %c0_i32 = arith.constant 0 : i32
    %c0_i32_0 = arith.constant 0 : i32
    return %arg0, %c0_i32 : i32, i32
  }
}

</mosaic_0001>

<llo_original>
// kernel: tpu_custom_call.1
$region0: #{tpu_custom_call.1}
  #allocation0 [shape = 'u32[]', space=smem, size = 0x4, offset = 0x4, fixed_abs, tag = 'smem constant byte address 0x4 - core index']
  #allocation1 [shape = 'u32[144,128]{1,0:T(1,128)}', space=vmem, size = 0x12000, scoped, tag = 'internal scratch']
  #allocation2 [shape = 'f32[1,1]{1,0:T(1,128)S(6)}', space=smem, size = 0x200, scoped, tag = 'scoped memory for tpu_custom_call.1']
  #allocation3 [shape = 'f32[1,1]{1,0:T(1,128)S(6)}', space=smem, size = 0x200, scoped, tag = 'scoped memory for tpu_custom_call.1']
  %s0 = inlined_call_operand.hbm [shape: f32[547,128], index: 0, kind: input, shape index: {}]
  %s1 = inlined_call_operand.<no memory space> [shape: f32[1,1], index: 1, kind: input, shape index: {}]
  %s2 = inlined_call_operand.<no memory space> [shape: f32[1,1], index: 2, kind: input, shape index: {}]
  %s3 = inlined_call_operand.hbm [shape: f32[547,128], index: 3, kind: output, shape index: {}]
  %s4 = sld [smem:[#allocation0]]
  $region49: #{tpu_custom_call.1} parent=0
    _
  %s6 = ssub.s32 1, %s4
  %s7 = scalar_select 0, %s6, %s4
  %8 = sst [smem:[#allocation2]] %s1
  %9 = sst [smem:[#allocation3]] %s2
  $region1: #{tpu_custom_call.1} parent=0
    #allocation4 [shape = 'u8[73728]{0}', space=vmem, size = 0x12000, scoped, tag = 'input window, operand 0']
    #allocation5 [shape = 's32[2]{0}', space=sflag, size = 0x8, scoped, tag = 'scoped memory for tpu_custom_call.1']
    #allocation6 [shape = 's32[2]{0}', space=sflag, size = 0x8, scoped, tag = 'scoped memory for tpu_custom_call.1']
    #allocation7 [shape = 'u8[73728]{0}', space=vmem, size = 0x12000, scoped, tag = 'output window, operand 0']
    %10 = vsyncpa [#allocation5], 0
    %s11 = scalar_lea.sflag [#allocation5], 1
    %12 = vsyncpa %s11, 0
    %13 = vsyncpa [#allocation6], 0
    %s14 = scalar_lea.sflag [#allocation6], 1
    %15 = vsyncpa %s14, 0
    loop: start=0, step=1, limit=10
    $region2: #{tpu_custom_call.1} parent=1 // loop_pre_header
      _
    $region3: #{tpu_custom_call.1} parent=1 // loop_header
      %s17 = sphi 0, %s21
      %p18 = scmp.ge.s32.totalorder %s17, 10
      %s27 = sphi 0, %s29
      %s30 = sphi 0, %s27
      %s31 = sphi 0, %s30
      %s47 = sphi 0, %s31
      %s51 = sphi 0, %s51
      %s53 = sphi 0, %s51
      %s54 = sphi 0, %s53
      %s68 = sphi 0, %s54
      %s72 = sphi 0, %s72
      %s74 = sphi 0, %s72
      %s75 = sphi 0, %s74
      %s89 = sphi 0, %s75
      %s95 = sphi 0, %s97
      %s98 = sphi 0, %s95
      %s99 = sphi 0, %s98
      %s115 = sphi 0, %s99
    $region4: #{tpu_custom_call.1} parent=1 // loop_header_branch
      %20 = sbr.rel (%p18) target = $region8
    $region5: #{tpu_custom_call.1} parent=1 // loop_body
      %s22 = ssub.s32 %s17, 1
      %s23 = ssub.s32 %s17, 2
      %s24 = sadd.s32 %s17, 1
      %s25 = ssub.s32 %s17, %s24
      %p26 = scmp.eq.s32.totalorder %s25, 0
      %s28 = sadd.s32 %s27, 1
      %s29 = scalar_select %p26, %s27, %s28
      %p32 = pneg %p26
      %p33 = scmp.eq.s32.totalorder %s17, 7
      %p34 = por %p32, %p33
      %p35 = scmp.ne.s32.totalorder %s27, %s30
      %p36 = scmp.eq.s32.totalorder %s17, 0
      %p37 = por %p35, %p36
      %p38 = scmp.ne.s32.totalorder %s27, %s30
      %p39 = scmp.eq.s32.totalorder %s22, 7
      %p40 = por %p38, %p39
      %p41 = scmp.ne.s32.totalorder %s30, %s31
      %p42 = scmp.eq.s32.totalorder %s22, 0
      %p43 = por %p41, %p42
      %p44 = scmp.ne.s32.totalorder %s30, %s31
      %p45 = scmp.eq.s32.totalorder %s23, 7
      %p46 = por %p44, %p45
      %p48 = scmp.ne.s32.totalorder %s31, %s47
      %p49 = scmp.eq.s32.totalorder %s23, 0
      %p50 = por %p48, %p49
      %s52 = sadd.s32 %s51, 1
      %p55 = scmp.eq.s32.totalorder %s17, 7
      %p56 = scmp.ne.s32.totalorder %s51, %s53
      %p57 = scmp.eq.s32.totalorder %s17, 0
      %p58 = por %p56, %p57
      %p59 = scmp.ne.s32.totalorder %s51, %s53
      %p60 = scmp.eq.s32.totalorder %s22, 7
      %p61 = por %p59, %p60
      %p62 = scmp.ne.s32.totalorder %s53, %s54
      %p63 = scmp.eq.s32.totalorder %s22, 0
      %p64 = por %p62, %p63
      %p65 = scmp.ne.s32.totalorder %s53, %s54
      %p66 = scmp.eq.s32.totalorder %s23, 7
      %p67 = por %p65, %p66
      %p69 = scmp.ne.s32.totalorder %s54, %s68
      %p70 = scmp.eq.s32.totalorder %s23, 0
      %p71 = por %p69, %p70
      %s73 = sadd.s32 %s72, 1
      %p76 = scmp.eq.s32.totalorder %s17, 7
      %p77 = scmp.ne.s32.totalorder %s72, %s74
      %p78 = scmp.eq.s32.totalorder %s17, 0
      %p79 = por %p77, %p78
      %p80 = scmp.ne.s32.totalorder %s72, %s74
      %p81 = scmp.eq.s32.totalorder %s22, 7
      %p82 = por %p80, %p81
      %p83 = scmp.ne.s32.totalorder %s74, %s75
      %p84 = scmp.eq.s32.totalorder %s22, 0
      %p85 = por %p83, %p84
      %p86 = scmp.ne.s32.totalorder %s74, %s75
      %p87 = scmp.eq.s32.totalorder %s23, 7
      %p88 = por %p86, %p87
      %p90 = scmp.ne.s32.totalorder %s75, %s89
      %p91 = scmp.eq.s32.totalorder %s23, 0
      %p92 = por %p90, %p91
      %s93 = ssub.s32 %s17, %s24
      %p94 = scmp.eq.s32.totalorder %s93, 0
      %s96 = sadd.s32 %s95, 1
      %s97 = scalar_select %p94, %s95, %s96
      %p100 = pneg %p94
      %p101 = scmp.eq.s32.totalorder %s17, 7
      %p102 = por %p100, %p101
      %p103 = scmp.ne.s32.totalorder %s95, %s98
      %p104 = scmp.eq.s32.totalorder %s17, 0
      %p105 = por %p103, %p104
      %p106 = scmp.ne.s32.totalorder %s95, %s98
      %p107 = scmp.eq.s32.totalorder %s22, 7
      %p108 = por %p106, %p107
      %p109 = scmp.ne.s32.totalorder %s98, %s99
      %p110 = scmp.eq.s32.totalorder %s22, 0
      %p111 = por %p109, %p110
      %p112 = scmp.ne.s32.totalorder %s98, %s99
      %p113 = scmp.eq.s32.totalorder %s23, 7
      %p114 = por %p112, %p113
      %p116 = scmp.ne.s32.totalorder %s99, %s115
      %p117 = scmp.eq.s32.totalorder %s23, 0
      %p118 = por %p116, %p117
      %p119 = scmp.le.s32.totalorder 1, %s17
      %p120 = scmp.lt.s32.totalorder %s17, 9
      %p121 = pnand %p119, %p120
      %p122 = pneg %p121
      // Predicated region
      $region9: #{tpu_custom_call.1} parent=5 // pred_check
        _
      $region10: #{tpu_custom_call.1} parent=5 // pred_check_branch
        %124 = sbr.rel (%p121) target = $region12
      $region11: #{tpu_custom_call.1} parent=5 // pred_region
        %s125 = ssub.s32 %s17, 1
        // Predicated region
        $region13: #{tpu_custom_call.1} parent=11 // pred_check
          %p126 = pneg %p64
        $region14: #{tpu_custom_call.1} parent=11 // pred_check_branch
          %128 = sbr.rel (%p126) target = $region16
        $region15: #{tpu_custom_call.1} parent=11 // pred_region
          _
        $region16: #{tpu_custom_call.1} parent=11 // pred_fallthru
          _
        // Predicated region
        $region17: #{tpu_custom_call.1} parent=11 // pred_check
          %p129 = pneg %p85
        $region18: #{tpu_custom_call.1} parent=11 // pred_check_branch
          %131 = sbr.rel (%p129) target = $region20
        $region19: #{tpu_custom_call.1} parent=11 // pred_region
          _
        $region20: #{tpu_custom_call.1} parent=11 // pred_fallthru
          _
      $region12: #{tpu_custom_call.1} parent=5 // pred_fallthru
        _
      %p132 = scmp.lt.s32.totalorder %s17, 8
      // Predicated region
      $region21: #{tpu_custom_call.1} parent=5 // pred_check
        %p133 = pneg %p132
      $region22: #{tpu_custom_call.1} parent=5 // pred_check_branch
        %135 = sbr.rel (%p133) target = $region24
      $region23: #{tpu_custom_call.1} parent=5 // pred_region
        // Predicated region
        $region25: #{tpu_custom_call.1} parent=23 // pred_check
          %p136 = pneg %p37
        $region26: #{tpu_custom_call.1} parent=23 // pred_check_branch
          %138 = sbr.rel (%p136) target = $region28
        $region27: #{tpu_custom_call.1} parent=23 // pred_region
          %s139 = sand.u32 %s27, 1
          %s140 = scalar_lea.sflag [#allocation5], %s139
          %s141 = sand.u32 %s27, 1
          %s142 = smul.addr %s141, 72
          %s143 = scalar_lea.vmem [#allocation4], %s142
          %s144 = smul.u32 9, %s17
          %s145 = ssub.s32 69, %s144
          %p146 = scmp.lt.s32.totalorder %s145, 9
          %s147 = scalar_select %p146, %s145, 9
          %s148 = smul.u32 128, %s147
          %s150 = ssub.s32 1152, %s148
          %151 = vsyncadd %s140, %s150
          %p152 = scmp.ne.s32.totalorder 0, %s148
          %s153 = smul.addr %s144, 128
          %s154 = scalar_lea.hbm %s0, %s153
          %s155 = smul.u32 8, %s147
          %s156 = sshll.u32 %s143, 4
          %s157 = int_to_ptr.vmem [resolvable:$true] %s156
          %s158 = sshll.u32 %s155, 4
          %162 = dma.hbm_to_vmem [thread:$0]  (%p152), %s154, %s158, %s157, %s140, 128, 128, 8
        $region28: #{tpu_custom_call.1} parent=23 // pred_fallthru
          _
      $region24: #{tpu_custom_call.1} parent=5 // pred_fallthru
        _
      %p163 = scmp.le.s32.totalorder 1, %s17
      %p164 = scmp.lt.s32.totalorder %s17, 9
      %p165 = pnand %p163, %p164
      %p166 = pneg %p165
      // Predicated region
      $region29: #{tpu_custom_call.1} parent=5 // pred_check
        _
      $region30: #{tpu_custom_call.1} parent=5 // pred_check_branch
        %168 = sbr.rel (%p165) target = $region32
      $region31: #{tpu_custom_call.1} parent=5 // pred_region
        %s169 = ssub.s32 %s17, 1
        %s170 = sand.u32 %s30, 1
        %s171 = scalar_lea.sflag [#allocation5], %s170
        %s172 = sand.u32 %s30, 1
        %s173 = smul.addr %s172, 72
        %s174 = scalar_lea.vmem [#allocation4], %s173
        // Predicated region
        $region33: #{tpu_custom_call.1} parent=31 // pred_check
          %p175 = pneg %p43
        $region34: #{tpu_custom_call.1} parent=31 // pred_check_branch
          %177 = sbr.rel (%p175) target = $region36
        $region35: #{tpu_custom_call.1} parent=31 // pred_region
          %178 = dma.done %s171, 1152
        $region36: #{tpu_custom_call.1} parent=31 // pred_fallthru
          _
        %s179 = sand.u32 %s30, 1
        %s180 = scalar_lea.sflag [#allocation5], %s179
        %s181 = sand.u32 %s30, 1
        %s182 = smul.addr %s181, 72
        %s183 = scalar_lea.vmem [#allocation4], %s182
        %p184 = pneg %p43
        %p185 = pneg %p40
        %p186 = pneg %p64
        %p187 = pneg %p61
        %p188 = pneg %p85
        %p189 = pneg %p82
        %p190 = pneg %p111
        %p191 = pneg %p108
        %s192 = sand.u32 %s98, 1
        %s193 = scalar_lea.sflag [#allocation6], %s192
        %s194 = sand.u32 %s98, 1
        %s195 = smul.addr %s194, 72
        %s196 = scalar_lea.vmem [#allocation7], %s195
        %s197 = smul.u32 9, %s22
        %s198 = ssub.s32 69, %s197
        %p199 = scmp.lt.s32.totalorder %s198, 9
        %s200 = scalar_select %p199, %s198, 9
        %s201 = smul.u32 128, %s200
        %s202 = smul.u32 9, %s22
        %s203 = ssub.s32 69, %s202
        %p204 = scmp.lt.s32.totalorder %s203, 9
        %s205 = scalar_select %p204, %s203, 9
        %s206 = smul.u32 128, %s205
        %s207 = sld [smem:[#allocation2]]
        %s208 = sld [smem:[#allocation3]]
        %v209 = vld [vmem:[%s174] sm:$0xff]
        %v210 = vld [vmem:[%s174 + $0x8] sm:$0xff]
        %v211 = vld [vmem:[%s174 + $0x10] sm:$0xff]
        %v212 = vld [vmem:[%s174 + $0x18] sm:$0xff]
        %v213 = vld [vmem:[%s174 + $0x20] sm:$0xff]
        %v214 = vld [vmem:[%s174 + $0x28] sm:$0xff]
        %v215 = vld [vmem:[%s174 + $0x30] sm:$0xff]
        %v216 = vld [vmem:[%s174 + $0x38] sm:$0xff]
        %v217 = vld [vmem:[%s174 + $0x40] sm:$0xff]
        %v218 = vstv %s207
        %v219 = vmul.f32 %v209, %v218
        %v220 = vmul.f32 %v210, %v218
        %v221 = vmul.f32 %v211, %v218
        %v222 = vmul.f32 %v212, %v218
        %v223 = vmul.f32 %v213, %v218
        %v224 = vmul.f32 %v214, %v218
        %v225 = vmul.f32 %v215, %v218
        %v226 = vmul.f32 %v216, %v218
        %v227 = vmul.f32 %v217, %v218
        %v228 = vstv %s208
        %v229 = vadd.f32 %v219, %v228
        %v230 = vadd.f32 %v220, %v228
        %v231 = vadd.f32 %v221, %v228
        %v232 = vadd.f32 %v222, %v228
        %v233 = vadd.f32 %v223, %v228
        %v234 = vadd.f32 %v224, %v228
        %v235 = vadd.f32 %v225, %v228
        %v236 = vadd.f32 %v226, %v228
        %v237 = vadd.f32 %v227, %v228
        %238 = vst [vmem:[%s196] sm:$0xff] %v229
        %239 = vst [vmem:[%s196 + $0x8] sm:$0xff] %v230
        %240 = vst [vmem:[%s196 + $0x10] sm:$0xff] %v231
        %241 = vst [vmem:[%s196 + $0x18] sm:$0xff] %v232
        %242 = vst [vmem:[%s196 + $0x20] sm:$0xff] %v233
        %243 = vst [vmem:[%s196 + $0x28] sm:$0xff] %v234
        %244 = vst [vmem:[%s196 + $0x30] sm:$0xff] %v235
        %245 = vst [vmem:[%s196 + $0x38] sm:$0xff] %v236
        %246 = vst [vmem:[%s196 + $0x40] sm:$0xff] %v237
        %s247 = sand.u32 %s98, 1
        %s248 = scalar_lea.sflag [#allocation6], %s247
        %s249 = sand.u32 %s98, 1
        %s250 = smul.addr %s249, 72
        %s251 = scalar_lea.vmem [#allocation7], %s250
        // Predicated region
        $region37: #{tpu_custom_call.1} parent=31 // pred_check
          %p252 = pneg %p108
        $region38: #{tpu_custom_call.1} parent=31 // pred_check_branch
          %254 = sbr.rel (%p252) target = $region40
        $region39: #{tpu_custom_call.1} parent=31 // pred_region
          %s255 = smul.u32 9, %s22
          %s256 = ssub.s32 69, %s255
          %p257 = scmp.lt.s32.totalorder %s256, 9
          %s258 = scalar_select %p257, %s256, 9
          %s259 = smul.u32 128, %s258
          %s261 = ssub.s32 1152, %s259
          %262 = vsyncadd %s248, %s261
          %p263 = scmp.ne.s32.totalorder 0, %s259
          %s264 = smul.addr %s255, 128
          %s265 = scalar_lea.hbm %s3, %s264
          %s266 = smul.u32 8, %s258
          %s267 = sshll.u32 %s251, 4
          %s268 = int_to_ptr.vmem [resolvable:$true] %s267
          %s269 = sshll.u32 %s266, 4
          %273 = dma.vmem_to_hbm [thread:$0]  (%p263), %s268, %s269, %s265, %s248, 128, 128, 8
        $region40: #{tpu_custom_call.1} parent=31 // pred_fallthru
          _
      $region32: #{tpu_custom_call.1} parent=5 // pred_fallthru
        _
      %p274 = scmp.le.s32.totalorder 2, %s17
      // Predicated region
      $region41: #{tpu_custom_call.1} parent=5 // pred_check
        %p275 = pneg %p274
      $region42: #{tpu_custom_call.1} parent=5 // pred_check_branch
        %277 = sbr.rel (%p275) target = $region44
      $region43: #{tpu_custom_call.1} parent=5 // pred_region
        %s278 = ssub.s32 %s17, 2
        // Predicated region
        $region45: #{tpu_custom_call.1} parent=43 // pred_check
          %p279 = pneg %p114
        $region46: #{tpu_custom_call.1} parent=43 // pred_check_branch
          %281 = sbr.rel (%p279) target = $region48
        $region47: #{tpu_custom_call.1} parent=43 // pred_region
          %s282 = sand.u32 %s99, 1
          %s283 = scalar_lea.sflag [#allocation6], %s282
          %s284 = sand.u32 %s99, 1
          %s285 = smul.addr %s284, 72
          %s286 = scalar_lea.vmem [#allocation7], %s285
          %287 = dma.done %s283, 1152
        $region48: #{tpu_custom_call.1} parent=43 // pred_fallthru
          _
      $region44: #{tpu_custom_call.1} parent=5 // pred_fallthru
        _
    $region6: #{tpu_custom_call.1} parent=1 // loop_footer
      %s21 = sadd.s32 1, %s17
    $region7: #{tpu_custom_call.1} parent=1 // loop_footer_branch
      %16 = sbr.rel target = $region3
    $region8: #{tpu_custom_call.1} parent=1 // loop_exit
      _
    %288 = vsyncpa [#allocation5], 1
    %s289 = scalar_lea.sflag [#allocation5], 1
    %290 = vsyncpa %s289, 1
    %291 = vsyncpa [#allocation6], 1
    %s292 = scalar_lea.sflag [#allocation6], 1
    %293 = vsyncpa %s292, 1

</llo_original>
